<compile_context>
chip_gen: v6e
topology: v6e:2x2x1
jax: 0.10.0
libtpu: 0.0.40
codegen_flags: <defaults>
</compile_context>

<pallas_src>
import functools

import jax
import jax.numpy as jnp
from jax.experimental import pallas as pl
from jax.experimental.pallas import tpu as pltpu


# ---------------------------------------------------------------------------
# Pallas kernels
# ---------------------------------------------------------------------------

def _mm_bias_act_kernel(a_ref, b_ref, bias_ref, o_ref, *, relu):
    """Full-K matmul: bf16 A/B on the MXU, f32 accumulate, fused bias (+ReLU)."""
    acc = jnp.dot(a_ref[...], b_ref[...], preferred_element_type=jnp.float32)
    acc = acc + bias_ref[...]
    if relu:
        acc = jnp.maximum(acc, 0.0)
    o_ref[...] = acc.astype(o_ref.dtype)


def _mm_bias_add_relu_kernel(a_ref, b_ref, bias_ref, res_ref, o_ref):
    """Same as above but with the bottleneck residual add + ReLU fused in."""
    acc = jnp.dot(a_ref[...], b_ref[...], preferred_element_type=jnp.float32)
    acc = acc + bias_ref[...] + res_ref[...].astype(jnp.float32)
    o_ref[...] = jnp.maximum(acc, 0.0).astype(o_ref.dtype)


def _maxpool_kernel(ee_ref, eo_ref, oe_ref, oo_ref, o_ref):
    """3x3 / stride-2 / pad-1 max pool for one image.

    Inputs are the (even/odd row) x (even/odd column) parity planes of the
    -inf-padded image, each (1, Ho+1, Wo+1, C); every tap of the 3x3 window is
    then a static 0/+1 shifted slice, so no 9x window blow-up is materialized.
    """
    Ho, Wo = o_ref.shape[1], o_ref.shape[2]
    m = ee_ref[0, :Ho, :Wo, :]
    m = jnp.maximum(m, eo_ref[0, :Ho, :Wo, :])
    m = jnp.maximum(m, oe_ref[0, :Ho, :Wo, :])
    m = jnp.maximum(m, oo_ref[0, :Ho, :Wo, :])
    m = jnp.maximum(m, ee_ref[0, :Ho, 1:Wo + 1, :])
    m = jnp.maximum(m, oe_ref[0, :Ho, 1:Wo + 1, :])
    m = jnp.maximum(m, ee_ref[0, 1:Ho + 1, :Wo, :])
    m = jnp.maximum(m, eo_ref[0, 1:Ho + 1, :Wo, :])
    m = jnp.maximum(m, ee_ref[0, 1:Ho + 1, 1:Wo + 1, :])
    o_ref[0] = m


def _avgpool_kernel(x_ref, o_ref):
    """Adaptive average pool to 1x1 for one image: (1, H*W, C) -> (1, 1, C) f32."""
    o_ref[0] = jnp.mean(x_ref[0].astype(jnp.float32), axis=0, keepdims=True)


# ---------------------------------------------------------------------------
# Pallas wrappers
# ---------------------------------------------------------------------------

def _pick_tile(dim, candidates):
    for c in candidates:
        if dim % c == 0:
            return c
    return dim  # full-dim block: legal even when not an (8, 128) multiple


def matmul_bias_act(a, b, bias, *, relu, residual=None, out_dtype=jnp.bfloat16):
    """y = a @ b + bias (+ residual) (+ ReLU).

    a: (M, K), b: (K, N) bf16, bias: (1, N) f32, residual: optional (M, N).
    Single k-step (full-K blocks), 2-D fully-parallel grid, bf16 MXU inputs,
    f32 accumulation, fused epilogue.
    """
    M, K = a.shape
    K2, N = b.shape
    assert K == K2
    a = a.astype(jnp.bfloat16)
    b = b.astype(jnp.bfloat16)

    tm = _pick_tile(M, (512, 256, 128, 64, 32, 16, 8))
    # Keep >=2 blocks on the N axis when the M axis collapsed to one block
    # (v7x has two TensorCores to feed).
    tn_candidates = (128, 256) if (M // tm) == 1 else (256, 128)
    tn = _pick_tile(N, tn_candidates)
    grid = (M // tm, N // tn)

    in_specs = [
        pl.BlockSpec((tm, K), lambda i, j: (i, 0)),
        pl.BlockSpec((K, tn), lambda i, j: (0, j)),
        pl.BlockSpec((1, tn), lambda i, j: (0, j)),
    ]
    args = [a, b, bias]
    if residual is None:
        kernel = functools.partial(_mm_bias_act_kernel, relu=relu)
    else:
        kernel = _mm_bias_add_relu_kernel
        in_specs.append(pl.BlockSpec((tm, tn), lambda i, j: (i, j)))
        args.append(residual)

    return pl.pallas_call(
        kernel,
        out_shape=jax.ShapeDtypeStruct((M, N), out_dtype),
        grid_spec=pltpu.PrefetchScalarGridSpec(
            num_scalar_prefetch=0,
            grid=grid,
            in_specs=in_specs,
            out_specs=pl.BlockSpec((tm, tn), lambda i, j: (i, j))),
        compiler_params=pltpu.CompilerParams(
            dimension_semantics=("parallel", "parallel"),
            vmem_limit_bytes=32 * 1024 * 1024),
    )(*args)


def maxpool_3x3_s2_p1(x):
    """3x3 / stride 2 / pad 1 max pool, NHWC (H, W even)."""
    N, H, W, C = x.shape
    Ho, Wo = H // 2, W // 2
    xp = jnp.pad(x, ((0, 0), (1, 1), (1, 1), (0, 0)),
                 constant_values=-jnp.inf)
    # Parity split (free reshape + 4 quarter-size slices); the kernel then only
    # needs static 0/+1 shifts to realise every tap of the 3x3 window.
    xr = xp.reshape(N, Ho + 1, 2, Wo + 1, 2, C)
    ee = xr[:, :, 0, :, 0, :]
    eo = xr[:, :, 0, :, 1, :]
    oe = xr[:, :, 1, :, 0, :]
    oo = xr[:, :, 1, :, 1, :]
    plane_spec = pl.BlockSpec((1, Ho + 1, Wo + 1, C), lambda n: (n, 0, 0, 0))
    return pl.pallas_call(
        _maxpool_kernel,
        out_shape=jax.ShapeDtypeStruct((N, Ho, Wo, C), x.dtype),
        grid_spec=pltpu.PrefetchScalarGridSpec(
            num_scalar_prefetch=0,
            grid=(N,),
            in_specs=[plane_spec, plane_spec, plane_spec, plane_spec],
            out_specs=pl.BlockSpec((1, Ho, Wo, C), lambda n: (n, 0, 0, 0))),
        compiler_params=pltpu.CompilerParams(
            dimension_semantics=("parallel",),
            vmem_limit_bytes=32 * 1024 * 1024),
    )(ee, eo, oe, oo)


def global_avgpool(x):
    """Adaptive average pool to 1x1, NHWC -> (N, C) float32."""
    N, H, W, C = x.shape
    xr = x.reshape(N, H * W, C)
    out = pl.pallas_call(
        _avgpool_kernel,
        out_shape=jax.ShapeDtypeStruct((N, 1, C), jnp.float32),
        grid_spec=pltpu.PrefetchScalarGridSpec(
            num_scalar_prefetch=0,
            grid=(N,),
            in_specs=[pl.BlockSpec((1, H * W, C), lambda n: (n, 0, 0))],
            out_specs=pl.BlockSpec((1, 1, C), lambda n: (n, 0, 0))),
        compiler_params=pltpu.CompilerParams(
            dimension_semantics=("parallel",)),
    )(xr)
    return out.reshape(N, C)


# ---------------------------------------------------------------------------
# Convolution = (1x1: plain reshape | kxk: bf16 im2col) + fused Pallas matmul
# ---------------------------------------------------------------------------

def _im2col(x, kh, kw, stride, padding):
    N, H, W, C = x.shape
    xp = jnp.pad(x, ((0, 0), (padding, padding), (padding, padding), (0, 0)))
    Ho = (H + 2 * padding - kh) // stride + 1
    Wo = (W + 2 * padding - kw) // stride + 1
    cols = []
    for i in range(kh):
        for j in range(kw):
            cols.append(xp[:, i:i + stride * Ho:stride,
                           j:j + stride * Wo:stride, :])
    return jnp.concatenate(cols, axis=-1), Ho, Wo  # (N, Ho, Wo, kh*kw*C)


def conv_bn_act(x, p, *, relu, residual=None):
    """x NHWC bf16; p holds a BN-folded (K, Cout) bf16 weight matrix + f32 bias.
    Optional residual (N, Ho, Wo, Cout) is added (and ReLU applied) inside the
    matmul epilogue."""
    kh, kw, stride, pad = p["kh"], p["kw"], p["stride"], p["pad"]
    N = x.shape[0]
    cout = p["w"].shape[1]
    if kh == 1 and kw == 1 and pad == 0:
        xs = x if stride == 1 else x[:, ::stride, ::stride, :]
        Ho, Wo = xs.shape[1], xs.shape[2]
        a = xs.reshape(N * Ho * Wo, xs.shape[3])
    else:
        # TODO(synk): patch extraction still materializes a bf16 im2col matrix.
        cols, Ho, Wo = _im2col(x, kh, kw, stride, pad)
        a = cols.reshape(N * Ho * Wo, cols.shape[-1])
    res = None if residual is None else residual.reshape(N * Ho * Wo, cout)
    y = matmul_bias_act(a, p["w"], p["b"], relu=relu, residual=res,
                        out_dtype=jnp.bfloat16)
    return y.reshape(N, Ho, Wo, cout)


# ---------------------------------------------------------------------------
# Parameters (deterministic synthetic init; BN folded; weights stored as bf16
# (K, Cout) matrices so the hot path never reshapes/casts weights)
# ---------------------------------------------------------------------------

def _fold_bn(w, gamma, beta, mean, var, eps=1e-5):
    scale = gamma / jnp.sqrt(var + eps)
    return w * scale[:, None, None, None], beta - mean * scale


def _conv_bn_params(key, cout, cin, kh, kw, stride, pad):
    k1, k2, k3 = jax.random.split(key, 3)
    fan_in = cin * kh * kw
    w = jax.random.normal(k1, (cout, cin, kh, kw), jnp.float32) * jnp.sqrt(
        2.0 / fan_in)
    gamma = 1.0 + 0.1 * jax.random.normal(k2, (cout,), jnp.float32)
    beta = 0.1 * jax.random.normal(k3, (cout,), jnp.float32)
    mean = jnp.zeros((cout,), jnp.float32)
    var = jnp.ones((cout,), jnp.float32)
    wf, bf = _fold_bn(w, gamma, beta, mean, var)
    # (Cout, Cin, kh, kw) -> (kh*kw*Cin, Cout), matching im2col (i, j, c) order.
    wm = jnp.transpose(wf, (2, 3, 1, 0)).reshape(kh * kw * cin, cout)
    return {"w": wm.astype(jnp.bfloat16), "b": bf.reshape(1, cout),
            "kh": kh, "kw": kw, "stride": stride, "pad": pad}


def _make_bottleneck_params(key, in_ch, width, stride):
    keys = jax.random.split(key, 4)
    p = {"conv1": _conv_bn_params(keys[0], width, in_ch, 1, 1, 1, 0),
         "conv2": _conv_bn_params(keys[1], width, width, 3, 3, stride, 1),
         "conv3": _conv_bn_params(keys[2], width * 4, width, 1, 1, 1, 0)}
    if stride != 1 or in_ch != width * 4:
        p["downsample"] = _conv_bn_params(keys[3], width * 4, in_ch, 1, 1,
                                          stride, 0)
    return p


def make_resnet50_params(key, num_classes=40):
    params = {}
    key, k = jax.random.split(key)
    params["conv1"] = _conv_bn_params(k, 64, 3, 7, 7, 2, 3)
    in_ch = 64
    for name, width, nblocks, stride in (("layer1", 64, 3, 1),
                                         ("layer2", 128, 4, 2),
                                         ("layer3", 256, 6, 2),
                                         ("layer4", 512, 3, 2)):
        blocks = []
        for bi in range(nblocks):
            key, k = jax.random.split(key)
            blocks.append(_make_bottleneck_params(
                k, in_ch, width, stride if bi == 0 else 1))
            in_ch = width * 4
        params[name] = blocks
    key, k1, k2 = jax.random.split(key, 3)
    # classifier: Linear(in_features*2 = 4096, num_classes); stored as (4096, nc)
    params["fc_w"] = (0.01 * jax.random.normal(
        k1, (2048 * 2, num_classes), jnp.float32)).astype(jnp.bfloat16)
    params["fc_b"] = (0.01 * jax.random.normal(
        k2, (num_classes,), jnp.float32)).reshape(1, num_classes)
    return params


# ---------------------------------------------------------------------------
# Forward pass
# ---------------------------------------------------------------------------

def _bottleneck(x, p):
    out = conv_bn_act(x, p["conv1"], relu=True)
    out = conv_bn_act(out, p["conv2"], relu=True)
    if "downsample" in p:
        identity = conv_bn_act(x, p["downsample"], relu=False)
    else:
        identity = x
    # conv3 + (folded) BN + residual add + ReLU fused into one matmul epilogue.
    return conv_bn_act(out, p["conv3"], relu=True, residual=identity)


def _features(x, params):
    x = conv_bn_act(x, params["conv1"], relu=True)
    x = maxpool_3x3_s2_p1(x)
    for name in ("layer1", "layer2", "layer3", "layer4"):
        for bp in params[name]:
            x = _bottleneck(x, bp)
    return x


def resnet50_twin_forward(left_nchw, right_nchw, params):
    B = left_nchw.shape[0]
    # Share one backbone trace by stacking left/right along batch.
    x = jnp.concatenate([left_nchw, right_nchw], axis=0)
    x = jnp.transpose(x, (0, 2, 3, 1)).astype(jnp.bfloat16)   # NCHW -> NHWC
    f = _features(x, params)                                  # (2B, Hf, Wf, 2048)
    feats = jnp.concatenate([f[:B], f[B:]], axis=-1)          # (B, Hf, Wf, 4096)
    pooled = global_avgpool(feats)                            # (B, 4096) f32
    return matmul_bias_act(pooled, params["fc_w"], params["fc_b"],
                           relu=False, out_dtype=jnp.float32)  # (B, num_classes)


# ---------------------------------------------------------------------------
# Main
# ---------------------------------------------------------------------------

if __name__ == "__main__":
    key = jax.random.PRNGKey(0)
    kp, kl, kr = jax.random.split(key, 3)

    params = make_resnet50_params(kp, num_classes=40)

    # Small but architecture-consistent inputs: RGB, 32x32 (final stride-32 map
    # is 1x1), batch of 2 per branch.
    left_x = jax.random.normal(kl, (2, 3, 32, 32), jnp.float32)
    right_x = jax.random.normal(kr, (2, 3, 32, 32), jnp.float32)

    out = resnet50_twin_forward(left_x, right_x, params)
    out = jax.block_until_ready(out)

    assert out.shape == (2, 40), out.shape
    assert bool(jnp.all(jnp.isfinite(out)))
    print("KERNEL_OK")
</pallas_src>

<mosaic_0001>
module attributes {stable_mosaic.version = 11 : i64} {
  func.func @_mm_bias_act_kernel(%arg0: i32, %arg1: i32, %arg2: memref<512x147xbf16, #tpu.memory_space<vmem>>, %arg3: memref<147x64xbf16, #tpu.memory_space<vmem>>, %arg4: memref<1x64xf32, #tpu.memory_space<vmem>>, %arg5: memref<512x64xbf16, #tpu.memory_space<vmem>>) attributes {dimension_semantics = [#tpu.dimension_semantics<parallel>, #tpu.dimension_semantics<parallel>], iteration_bounds = array<i64: 2, 1>, scalar_prefetch = 0 : i64, scratch_operands = 0 : i64, tpu.core_type = #tpu.core_type<tc>, window_params = [{transform_indices = @transform_0, window_bounds = array<i64: 512, 147>}, {transform_indices = @transform_1, window_bounds = array<i64: 147, 64>}, {transform_indices = @transform_2, window_bounds = array<i64: 1, 64>}, {transform_indices = @transform_3, window_bounds = array<i64: 512, 64>}]} {
    %c0 = arith.constant 0 : index
    %c0_0 = arith.constant 0 : index
    %0 = vector.load %arg2[%c0, %c0_0] : memref<512x147xbf16, #tpu.memory_space<vmem>>, vector<512x147xbf16>
    %c0_1 = arith.constant 0 : index
    %c0_2 = arith.constant 0 : index
    %1 = vector.load %arg3[%c0_1, %c0_2] : memref<147x64xbf16, #tpu.memory_space<vmem>>, vector<147x64xbf16>
    %cst = arith.constant dense<0.000000e+00> : vector<512x64xf32>
    %2 = tpu.matmul %0, %1, %cst {dimension_numbers = #tpu.dot_dimension_numbers<[1], [0], [0], [1], [0, 0, 1, 1], [], []>} : vector<512x147xbf16>, vector<147x64xbf16>, vector<512x64xf32> -> vector<512x64xf32>
    %c0_3 = arith.constant 0 : index
    %c0_4 = arith.constant 0 : index
    %3 = vector.load %arg4[%c0_3, %c0_4] : memref<1x64xf32, #tpu.memory_space<vmem>>, vector<1x64xf32>
    %4 = vector.broadcast %3 : vector<1x64xf32> to vector<512x64xf32>
    %5 = arith.addf %2, %4 : vector<512x64xf32>
    %cst_5 = arith.constant 0.000000e+00 : f32
    %6 = vector.broadcast %cst_5 : f32 to vector<512x64xf32>
    %7 = arith.maximumf %5, %6 : vector<512x64xf32>
    %8 = arith.truncf %7 : vector<512x64xf32> to vector<512x64xbf16>
    %c0_6 = arith.constant 0 : index
    %c0_7 = arith.constant 0 : index
    %9 = vector.load %arg5[%c0_6, %c0_7] : memref<512x64xbf16, #tpu.memory_space<vmem>>, vector<512x64xbf16>
    tpu.vector_store %arg5[%c0_6, %c0_7], %8 {strides = array<i32>} : memref<512x64xbf16, #tpu.memory_space<vmem>>, vector<512x64xbf16>,
    return
  }
  func.func @transform_0(%arg0: i32, %arg1: i32) -> (i32, i32) {
    %c0_i32 = arith.constant 0 : i32
    %c0_i32_0 = arith.constant 0 : i32
    return %arg0, %c0_i32 : i32, i32
  }
  func.func @transform_1(%arg0: i32, %arg1: i32) -> (i32, i32) {
    %c0_i32 = arith.constant 0 : i32
    %c0_i32_0 = arith.constant 0 : i32
    return %c0_i32, %arg1 : i32, i32
  }
  func.func @transform_2(%arg0: i32, %arg1: i32) -> (i32, i32) {
    %c0_i32 = arith.constant 0 : i32
    %c0_i32_0 = arith.constant 0 : i32
    return %c0_i32, %arg1 : i32, i32
  }
  func.func @transform_3(%arg0: i32, %arg1: i32) -> (i32, i32) {
    %c0_i32 = arith.constant 0 : i32
    return %arg0, %arg1 : i32, i32
  }
}

</mosaic_0001>

<llo_original>
// kernel: tpu_custom_call.1
$region0: #{tpu_custom_call.1}
  #allocation0 [shape = 'u32[]', space=smem, size = 0x4, offset = 0x4, fixed_abs, tag = 'smem constant byte address 0x4 - core index']
  #allocation1 [shape = 'u32[144,128]{1,0:T(1,128)}', space=vmem, size = 0x12000, scoped, tag = 'internal scratch']
  %s0 = inlined_call_operand.vmem [shape: bf16[1024,147], index: 0, kind: input, shape index: {}]
  %s1 = inlined_call_operand.vmem [shape: bf16[147,64], index: 1, kind: input, shape index: {}]
  %s2 = inlined_call_operand.vmem [shape: f32[1,64], index: 2, kind: input, shape index: {}]
  %s3 = inlined_call_operand.vmem [shape: bf16[1024,64], index: 3, kind: output, shape index: {}]
  %s4 = sld [smem:[#allocation0]]
  $region45: #{tpu_custom_call.1} parent=0
    _
  %s6 = ssub.s32 1, %s4
  %s7 = scalar_select 0, %s6, %s4
  loop: start=0, step=1, limit=4
  $region2: #{tpu_custom_call.1} parent=0 // loop_pre_header
    _
  $region3: #{tpu_custom_call.1} parent=0 // loop_header
    %s9 = sphi 0, %s13
    %p10 = scmp.ge.s32.totalorder %s9, 4
    %s16 = sphi 0, %s28
    %s17 = sphi 0, %s24
    %s18 = sphi 0, %s16
    %s19 = sphi 0, %s17
    %s20 = sphi 0, %s18
    %s21 = sphi 0, %s19
    %s31 = sphi 0, %s33
    %s34 = sphi 0, %s31
    %s35 = sphi 0, %s34
    %s51 = sphi 0, %s35
    %s57 = sphi 0, %s59
    %s60 = sphi 0, %s57
    %s61 = sphi 0, %s60
    %s77 = sphi 0, %s61
    %s83 = sphi 0, %s85
    %s86 = sphi 0, %s83
    %s87 = sphi 0, %s86
    %s103 = sphi 0, %s87
    %s111 = sphi 0, %s113
    %s114 = sphi 0, %s111
    %s115 = sphi 0, %s114
    %s131 = sphi 0, %s115
  $region4: #{tpu_custom_call.1} parent=0 // loop_header_branch
    %12 = sbr.rel (%p10) target = $region8
  $region5: #{tpu_custom_call.1} parent=0 // loop_body
    %s14 = ssub.s32 %s9, 1
    %s15 = ssub.s32 %s9, 2
    %s22 = sadd.s32 1, %s17
    %p23 = scmp.ge.s32.totalorder %s22, 1
    %s24 = scalar_select %p23, 0, %s22
    %s25 = sadd.s32 1, %s16
    %s26 = scalar_select %p23, %s25, %s16
    %p27 = scmp.ge.s32.totalorder %s26, 2
    %s28 = scalar_select %p27, 0, %s26
    %s29 = ssub.s32 %s16, %s28
    %p30 = scmp.eq.s32.totalorder %s29, 0
    %s32 = sadd.s32 %s31, 1
    %s33 = scalar_select %p30, %s31, %s32
    %p36 = pneg %p30
    %p37 = scmp.eq.s32.totalorder %s9, 1
    %p38 = por %p36, %p37
    %p39 = scmp.ne.s32.totalorder %s31, %s34
    %p40 = scmp.eq.s32.totalorder %s9, 0
    %p41 = por %p39, %p40
    %p42 = scmp.ne.s32.totalorder %s31, %s34
    %p43 = scmp.eq.s32.totalorder %s14, 1
    %p44 = por %p42, %p43
    %p45 = scmp.ne.s32.totalorder %s34, %s35
    %p46 = scmp.eq.s32.totalorder %s14, 0
    %p47 = por %p45, %p46
    %p48 = scmp.ne.s32.totalorder %s34, %s35
    %p49 = scmp.eq.s32.totalorder %s15, 1
    %p50 = por %p48, %p49
    %p52 = scmp.ne.s32.totalorder %s35, %s51
    %p53 = scmp.eq.s32.totalorder %s15, 0
    %p54 = por %p52, %p53
    %s55 = ssub.s32 %s17, %s24
    %p56 = scmp.eq.s32.totalorder %s55, 0
    %s58 = sadd.s32 %s57, 1
    %s59 = scalar_select %p56, %s57, %s58
    %p62 = pneg %p56
    %p63 = scmp.eq.s32.totalorder %s9, 1
    %p64 = por %p62, %p63
    %p65 = scmp.ne.s32.totalorder %s57, %s60
    %p66 = scmp.eq.s32.totalorder %s9, 0
    %p67 = por %p65, %p66
    %p68 = scmp.ne.s32.totalorder %s57, %s60
    %p69 = scmp.eq.s32.totalorder %s14, 1
    %p70 = por %p68, %p69
    %p71 = scmp.ne.s32.totalorder %s60, %s61
    %p72 = scmp.eq.s32.totalorder %s14, 0
    %p73 = por %p71, %p72
    %p74 = scmp.ne.s32.totalorder %s60, %s61
    %p75 = scmp.eq.s32.totalorder %s15, 1
    %p76 = por %p74, %p75
    %p78 = scmp.ne.s32.totalorder %s61, %s77
    %p79 = scmp.eq.s32.totalorder %s15, 0
    %p80 = por %p78, %p79
    %s81 = ssub.s32 %s17, %s24
    %p82 = scmp.eq.s32.totalorder %s81, 0
    %s84 = sadd.s32 %s83, 1
    %s85 = scalar_select %p82, %s83, %s84
    %p88 = pneg %p82
    %p89 = scmp.eq.s32.totalorder %s9, 1
    %p90 = por %p88, %p89
    %p91 = scmp.ne.s32.totalorder %s83, %s86
    %p92 = scmp.eq.s32.totalorder %s9, 0
    %p93 = por %p91, %p92
    %p94 = scmp.ne.s32.totalorder %s83, %s86
    %p95 = scmp.eq.s32.totalorder %s14, 1
    %p96 = por %p94, %p95
    %p97 = scmp.ne.s32.totalorder %s86, %s87
    %p98 = scmp.eq.s32.totalorder %s14, 0
    %p99 = por %p97, %p98
    %p100 = scmp.ne.s32.totalorder %s86, %s87
    %p101 = scmp.eq.s32.totalorder %s15, 1
    %p102 = por %p100, %p101
    %p104 = scmp.ne.s32.totalorder %s87, %s103
    %p105 = scmp.eq.s32.totalorder %s15, 0
    %p106 = por %p104, %p105
    %s107 = ssub.s32 %s16, %s28
    %s108 = ssub.s32 %s17, %s24
    %s109 = sor.u32 %s107, %s108
    %p110 = scmp.eq.s32.totalorder %s109, 0
    %s112 = sadd.s32 %s111, 1
    %s113 = scalar_select %p110, %s111, %s112
    %p116 = pneg %p110
    %p117 = scmp.eq.s32.totalorder %s9, 1
    %p118 = por %p116, %p117
    %p119 = scmp.ne.s32.totalorder %s111, %s114
    %p120 = scmp.eq.s32.totalorder %s9, 0
    %p121 = por %p119, %p120
    %p122 = scmp.ne.s32.totalorder %s111, %s114
    %p123 = scmp.eq.s32.totalorder %s14, 1
    %p124 = por %p122, %p123
    %p125 = scmp.ne.s32.totalorder %s114, %s115
    %p126 = scmp.eq.s32.totalorder %s14, 0
    %p127 = por %p125, %p126
    %p128 = scmp.ne.s32.totalorder %s114, %s115
    %p129 = scmp.eq.s32.totalorder %s15, 1
    %p130 = por %p128, %p129
    %p132 = scmp.ne.s32.totalorder %s115, %s131
    %p133 = scmp.eq.s32.totalorder %s15, 0
    %p134 = por %p132, %p133
    %p135 = scmp.le.s32.totalorder 1, %s9
    %p136 = scmp.lt.s32.totalorder %s9, 3
    %p137 = pnand %p135, %p136
    %p138 = pneg %p137
    // Predicated region
    $region9: #{tpu_custom_call.1} parent=5 // pred_check
      _
    $region10: #{tpu_custom_call.1} parent=5 // pred_check_branch
      %140 = sbr.rel (%p137) target = $region12
    $region11: #{tpu_custom_call.1} parent=5 // pred_region
      %s141 = ssub.s32 %s9, 1
      // Predicated region
      $region13: #{tpu_custom_call.1} parent=11 // pred_check
        %p142 = pneg %p73
      $region14: #{tpu_custom_call.1} parent=11 // pred_check_branch
        %144 = sbr.rel (%p142) target = $region16
      $region15: #{tpu_custom_call.1} parent=11 // pred_region
        %p145 = scmp.lt.s32.totalorder %s19, 0
        %s146 = scalar_select %p145, %s19, 0
        %s147 = smul.addr %s146, 4
        %s148 = scalar_lea.vmem %s1, %s147
      $region16: #{tpu_custom_call.1} parent=11 // pred_fallthru
        _
      // Predicated region
      $region17: #{tpu_custom_call.1} parent=11 // pred_check
        %p149 = pneg %p99
      $region18: #{tpu_custom_call.1} parent=11 // pred_check_branch
        %151 = sbr.rel (%p149) target = $region20
      $region19: #{tpu_custom_call.1} parent=11 // pred_region
        %p152 = scmp.lt.s32.totalorder %s19, 0
        %s153 = scalar_select %p152, %s19, 0
        %s154 = scalar_lea.vmem %s2, %s153
      $region20: #{tpu_custom_call.1} parent=11 // pred_fallthru
        _
    $region12: #{tpu_custom_call.1} parent=5 // pred_fallthru
      _
    %p155 = scmp.lt.s32.totalorder %s9, 2
    // Predicated region
    $region21: #{tpu_custom_call.1} parent=5 // pred_check
      %p156 = pneg %p155
    $region22: #{tpu_custom_call.1} parent=5 // pred_check_branch
      %158 = sbr.rel (%p156) target = $region24
    $region23: #{tpu_custom_call.1} parent=5 // pred_region
      // Predicated region
      $region25: #{tpu_custom_call.1} parent=23 // pred_check
        %p159 = pneg %p41
      $region26: #{tpu_custom_call.1} parent=23 // pred_check_branch
        %161 = sbr.rel (%p159) target = $region28
      $region27: #{tpu_custom_call.1} parent=23 // pred_region
        %s162 = smul.u32 64, %s16
        %p163 = scmp.lt.s32.totalorder %s162, 127
        %s164 = scalar_select %p163, %s162, 127
        %s165 = smul.addr %s164, 2
        %s166 = smul.addr %s165, 4
        %s167 = scalar_lea.vmem %s0, %s166
        %s168 = smul.u32 64, %s16
      $region28: #{tpu_custom_call.1} parent=23 // pred_fallthru
        _
    $region24: #{tpu_custom_call.1} parent=5 // pred_fallthru
      _
    %p169 = scmp.le.s32.totalorder 1, %s9
    %p170 = scmp.lt.s32.totalorder %s9, 3
    %p171 = pnand %p169, %p170
    %p172 = pneg %p171
    // Predicated region
    $region29: #{tpu_custom_call.1} parent=5 // pred_check
      _
    $region30: #{tpu_custom_call.1} parent=5 // pred_check_branch
      %174 = sbr.rel (%p171) target = $region32
    $region31: #{tpu_custom_call.1} parent=5 // pred_region
      %s175 = ssub.s32 %s9, 1
      %s176 = smul.u32 64, %s18
      %p177 = scmp.lt.s32.totalorder %s176, 127
      %s178 = scalar_select %p177, %s176, 127
      %s179 = smul.addr %s178, 2
      %s180 = smul.addr %s179, 4
      %s181 = scalar_lea.vmem %s0, %s180
      %p182 = pneg %p47
      %p183 = pneg %p44
      %p184 = scmp.lt.s32.totalorder %s19, 0
      %s185 = scalar_select %p184, %s19, 0
      %s186 = smul.addr %s185, 4
      %s187 = scalar_lea.vmem %s1, %s186
      %p188 = pneg %p73
      %p189 = pneg %p70
      %p190 = scmp.lt.s32.totalorder %s19, 0
      %s191 = scalar_select %p190, %s19, 0
      %s192 = scalar_lea.vmem %s2, %s191
      %p193 = pneg %p99
      %p194 = pneg %p96
      %p195 = pneg %p127
      %p196 = pneg %p124
      %s197 = smul.u32 64, %s18
      %p198 = scmp.lt.s32.totalorder %s197, 127
      %s199 = scalar_select %p198, %s197, 127
      %p200 = scmp.lt.s32.totalorder %s19, 0
      %s201 = scalar_select %p200, %s19, 0
      %s202 = sadd.s32 %s201, %s199
      %s203 = smul.addr %s202, 4
      %s204 = scalar_lea.vmem %s3, %s203
      %s205 = smul.u32 64, %s18
      %p206 = scmp.lt.s32.totalorder %s205, 127
      %s207 = scalar_select %p206, %s205, 127
      %s208 = smul.addr %s207, 2
      %s209 = smul.addr %s208, 4
      %s210 = scalar_lea.vmem %s0, %s209
      %s211 = smul.u32 64, %s18
      %p212 = scmp.lt.s32.totalorder %s19, 0
      %s213 = scalar_select %p212, %s19, 0
      %s214 = smul.addr %s213, 4
      %s215 = scalar_lea.vmem %s1, %s214
      %p216 = scmp.lt.s32.totalorder %s19, 0
      %s217 = scalar_select %p216, %s19, 0
      %s218 = scalar_lea.vmem %s2, %s217
      %s219 = smul.u32 64, %s18
      %p220 = scmp.lt.s32.totalorder %s219, 127
      %s221 = scalar_select %p220, %s219, 127
      %p222 = scmp.lt.s32.totalorder %s19, 0
      %s223 = scalar_select %p222, %s19, 0
      %s224 = sadd.s32 %s223, %s221
      %s225 = smul.addr %s224, 4
      %s226 = scalar_lea.vmem %s3, %s225
      %s227 = smul.u32 64, %s18
      %v229 = vld [vmem:[%s210] sm:$0xff]
      %v230 = vld [vmem:[%s210 + $0x8] sm:$0xff]
      %v231 = vld [vmem:[%s210 + $0x10] sm:$0xff]
      %v232 = vld [vmem:[%s210 + $0x18] sm:$0xff]
      %v233 = vld [vmem:[%s210 + $0x20] sm:$0xff]
      %v234 = vld [vmem:[%s210 + $0x28] sm:$0xff]
      %v235 = vld [vmem:[%s210 + $0x30] sm:$0xff]
      %v236 = vld [vmem:[%s210 + $0x38] sm:$0xff]
      %v237 = vld [vmem:[%s210 + $0x40] sm:$0xff]
      %v238 = vld [vmem:[%s210 + $0x48] sm:$0xff]
      %v239 = vld [vmem:[%s210 + $0x50] sm:$0xff]
      %v240 = vld [vmem:[%s210 + $0x58] sm:$0xff]
      %v241 = vld [vmem:[%s210 + $0x60] sm:$0xff]
      %v242 = vld [vmem:[%s210 + $0x68] sm:$0xff]
      %v243 = vld [vmem:[%s210 + $0x70] sm:$0xff]
      %v244 = vld [vmem:[%s210 + $0x78] sm:$0xff]
      %v245 = vld [vmem:[%s210 + $0x80] sm:$0xff]
      %v246 = vld [vmem:[%s210 + $0x88] sm:$0xff]
      %v247 = vld [vmem:[%s210 + $0x90] sm:$0xff]
      %v248 = vld [vmem:[%s210 + $0x98] sm:$0xff]
      %v249 = vld [vmem:[%s210 + $0xa0] sm:$0xff]
      %v250 = vld [vmem:[%s210 + $0xa8] sm:$0xff]
      %v251 = vld [vmem:[%s210 + $0xb0] sm:$0xff]
      %v252 = vld [vmem:[%s210 + $0xb8] sm:$0xff]
      %v253 = vld [vmem:[%s210 + $0xc0] sm:$0xff]
      %v254 = vld [vmem:[%s210 + $0xc8] sm:$0xff]
      %v255 = vld [vmem:[%s210 + $0xd0] sm:$0xff]
      %v256 = vld [vmem:[%s210 + $0xd8] sm:$0xff]
      %v257 = vld [vmem:[%s210 + $0xe0] sm:$0xff]
      %v258 = vld [vmem:[%s210 + $0xe8] sm:$0xff]
      %v259 = vld [vmem:[%s210 + $0xf0] sm:$0xff]
      %v260 = vld [vmem:[%s210 + $0xf8] sm:$0xff]
      %v261 = vld [vmem:[%s210 + $0x100] sm:$0xff]
      %v262 = vld [vmem:[%s210 + $0x108] sm:$0xff]
      %v263 = vld [vmem:[%s210 + $0x110] sm:$0xff]
      %v264 = vld [vmem:[%s210 + $0x118] sm:$0xff]
      %v265 = vld [vmem:[%s210 + $0x120] sm:$0xff]
      %v266 = vld [vmem:[%s210 + $0x128] sm:$0xff]
      %v267 = vld [vmem:[%s210 + $0x130] sm:$0xff]
      %v268 = vld [vmem:[%s210 + $0x138] sm:$0xff]
      %v269 = vld [vmem:[%s210 + $0x140] sm:$0xff]
      %v270 = vld [vmem:[%s210 + $0x148] sm:$0xff]
      %v271 = vld [vmem:[%s210 + $0x150] sm:$0xff]
      %v272 = vld [vmem:[%s210 + $0x158] sm:$0xff]
      %v273 = vld [vmem:[%s210 + $0x160] sm:$0xff]
      %v274 = vld [vmem:[%s210 + $0x168] sm:$0xff]
      %v275 = vld [vmem:[%s210 + $0x170] sm:$0xff]
      %v276 = vld [vmem:[%s210 + $0x178] sm:$0xff]
      %v277 = vld [vmem:[%s210 + $0x180] sm:$0xff]
      %v278 = vld [vmem:[%s210 + $0x188] sm:$0xff]
      %v279 = vld [vmem:[%s210 + $0x190] sm:$0xff]
      %v280 = vld [vmem:[%s210 + $0x198] sm:$0xff]
      %v281 = vld [vmem:[%s210 + $0x1a0] sm:$0xff]
      %v282 = vld [vmem:[%s210 + $0x1a8] sm:$0xff]
      %v283 = vld [vmem:[%s210 + $0x1b0] sm:$0xff]
      %v284 = vld [vmem:[%s210 + $0x1b8] sm:$0xff]
      %v285 = vld [vmem:[%s210 + $0x1c0] sm:$0xff]
      %v286 = vld [vmem:[%s210 + $0x1c8] sm:$0xff]
      %v287 = vld [vmem:[%s210 + $0x1d0] sm:$0xff]
      %v288 = vld [vmem:[%s210 + $0x1d8] sm:$0xff]
      %v289 = vld [vmem:[%s210 + $0x1e0] sm:$0xff]
      %v290 = vld [vmem:[%s210 + $0x1e8] sm:$0xff]
      %v291 = vld [vmem:[%s210 + $0x1f0] sm:$0xff]
      %v292 = vld [vmem:[%s210 + $0x1f8] sm:$0xff]
      %v293 = vld [vmem:[%s215] sm:$0xf]
      %v294 = vld [vmem:[%s215 + $0x4] sm:$0xf]
      %v295 = vld [vmem:[%s215 + $0x8] sm:$0xf]
      %v296 = vld [vmem:[%s215 + $0xc] sm:$0xf]
      %v297 = vld [vmem:[%s215 + $0x10] sm:$0xf]
      %v298 = vld [vmem:[%s215 + $0x14] sm:$0xf]
      %v299 = vld [vmem:[%s215 + $0x18] sm:$0xf]
      %v300 = vld [vmem:[%s215 + $0x1c] sm:$0xf]
      %v301 = vld [vmem:[%s215 + $0x20] sm:$0xf]
      %v302 = vld [vmem:[%s215 + $0x24] sm:$0xf]
      %v303 = vld [vmem:[%s215 + $0x28] sm:$0xf]
      %v304 = vld [vmem:[%s215 + $0x2c] sm:$0xf]
      %v305 = vld [vmem:[%s215 + $0x30] sm:$0xf]
      %v306 = vld [vmem:[%s215 + $0x34] sm:$0xf]
      %v307 = vld [vmem:[%s215 + $0x38] sm:$0xf]
      %v308 = vld [vmem:[%s215 + $0x3c] sm:$0xf]
      %v309 = vld [vmem:[%s215 + $0x40] sm:$0xf]
      %v310 = vld [vmem:[%s215 + $0x44] sm:$0xf]
      %v311 = vld [vmem:[%s215 + $0x48] sm:$0x3]
      %v312 = vld [vmem:[%s218] sm:$0x1]
      %v314 = vlaneseq
      %v315 = vshrl.u32 %v314, 7
      %v316 = vsub.s32 0, %v315
      %v317 = vrot.slane %v312, %v316
      %v383 = vunpack.c.l.b16 %v229
      %v384 = vunpack.c.h.b16 %v229
      %v385 = vunpack.c.l.b16 %v230
      %v386 = vunpack.c.h.b16 %v230
      %v387 = vunpack.c.l.b16 %v231
      %v388 = vunpack.c.h.b16 %v231
      %v389 = vunpack.c.l.b16 %v232
      %v390 = vunpack.c.h.b16 %v232
      %v391 = vunpack.c.l.b16 %v233
      %v392 = vunpack.c.h.b16 %v233
      %v393 = vunpack.c.l.b16 %v234
      %v394 = vunpack.c.h.b16 %v234
      %v395 = vunpack.c.l.b16 %v235
      %v396 = vunpack.c.h.b16 %v235
      %v397 = vunpack.c.l.b16 %v236
      %v398 = vunpack.c.h.b16 %v236
      %v399 = vunpack.c.l.b16 %v237
      %v400 = vunpack.c.h.b16 %v237
      %v401 = vunpack.c.l.b16 %v238
      %v402 = vunpack.c.h.b16 %v238
      %v403 = vunpack.c.l.b16 %v239
      %v404 = vunpack.c.h.b16 %v239
      %v405 = vunpack.c.l.b16 %v240
      %v406 = vunpack.c.h.b16 %v240
      %v407 = vunpack.c.l.b16 %v241
      %v408 = vunpack.c.h.b16 %v241
      %v409 = vunpack.c.l.b16 %v242
      %v410 = vunpack.c.h.b16 %v242
      %v411 = vunpack.c.l.b16 %v243
      %v412 = vunpack.c.h.b16 %v243
      %v413 = vunpack.c.l.b16 %v244
      %v414 = vunpack.c.h.b16 %v244
      %v415 = vunpack.c.l.b16 %v245
      %v416 = vunpack.c.h.b16 %v245
      %v417 = vunpack.c.l.b16 %v246
      %v418 = vunpack.c.h.b16 %v246
      %v419 = vunpack.c.l.b16 %v247
      %v420 = vunpack.c.h.b16 %v247
      %v421 = vunpack.c.l.b16 %v248
      %v422 = vunpack.c.h.b16 %v248
      %v423 = vunpack.c.l.b16 %v249
      %v424 = vunpack.c.h.b16 %v249
      %v425 = vunpack.c.l.b16 %v250
      %v426 = vunpack.c.h.b16 %v250
      %v427 = vunpack.c.l.b16 %v251
      %v428 = vunpack.c.h.b16 %v251
      %v429 = vunpack.c.l.b16 %v252
      %v430 = vunpack.c.h.b16 %v252
      %v431 = vunpack.c.l.b16 %v253
      %v432 = vunpack.c.h.b16 %v253
      %v433 = vunpack.c.l.b16 %v254
      %v434 = vunpack.c.h.b16 %v254
      %v435 = vunpack.c.l.b16 %v255
      %v436 = vunpack.c.h.b16 %v255
      %v437 = vunpack.c.l.b16 %v256
      %v438 = vunpack.c.h.b16 %v256
      %v439 = vunpack.c.l.b16 %v257
      %v440 = vunpack.c.h.b16 %v257
      %v441 = vunpack.c.l.b16 %v258
      %v442 = vunpack.c.h.b16 %v258
      %v443 = vunpack.c.l.b16 %v259
      %v444 = vunpack.c.h.b16 %v259
      %v445 = vunpack.c.l.b16 %v260
      %v446 = vunpack.c.h.b16 %v260
      %v447 = vunpack.c.l.b16 %v261
      %v448 = vunpack.c.h.b16 %v261
      %v449 = vunpack.c.l.b16 %v262
      %v450 = vunpack.c.h.b16 %v262
      %v451 = vunpack.c.l.b16 %v263
      %v452 = vunpack.c.h.b16 %v263
      %v453 = vunpack.c.l.b16 %v264
      %v454 = vunpack.c.h.b16 %v264
      %v455 = vunpack.c.l.b16 %v265
      %v456 = vunpack.c.h.b16 %v265
      %v457 = vunpack.c.l.b16 %v266
      %v458 = vunpack.c.h.b16 %v266
      %v459 = vunpack.c.l.b16 %v267
      %v460 = vunpack.c.h.b16 %v267
      %v461 = vunpack.c.l.b16 %v268
      %v462 = vunpack.c.h.b16 %v268
      %v463 = vunpack.c.l.b16 %v269
      %v464 = vunpack.c.h.b16 %v269
      %v465 = vunpack.c.l.b16 %v270
      %v466 = vunpack.c.h.b16 %v270
      %v467 = vunpack.c.l.b16 %v271
      %v468 = vunpack.c.h.b16 %v271
      %v469 = vunpack.c.l.b16 %v272
      %v470 = vunpack.c.h.b16 %v272
      %v471 = vunpack.c.l.b16 %v273
      %v472 = vunpack.c.h.b16 %v273
      %v473 = vunpack.c.l.b16 %v274
      %v474 = vunpack.c.h.b16 %v274
      %v475 = vunpack.c.l.b16 %v275
      %v476 = vunpack.c.h.b16 %v275
      %v477 = vunpack.c.l.b16 %v276
      %v478 = vunpack.c.h.b16 %v276
      %v479 = vunpack.c.l.b16 %v277
      %v480 = vunpack.c.h.b16 %v277
      %v481 = vunpack.c.l.b16 %v278
      %v482 = vunpack.c.h.b16 %v278
      %v483 = vunpack.c.l.b16 %v279
      %v484 = vunpack.c.h.b16 %v279
      %v485 = vunpack.c.l.b16 %v280
      %v486 = vunpack.c.h.b16 %v280
      %v487 = vunpack.c.l.b16 %v281
      %v488 = vunpack.c.h.b16 %v281
      %v489 = vunpack.c.l.b16 %v282
      %v490 = vunpack.c.h.b16 %v282
      %v491 = vunpack.c.l.b16 %v283
      %v492 = vunpack.c.h.b16 %v283
      %v493 = vunpack.c.l.b16 %v284
      %v494 = vunpack.c.h.b16 %v284
      %v495 = vunpack.c.l.b16 %v285
      %v496 = vunpack.c.h.b16 %v285
      %v497 = vunpack.c.l.b16 %v286
      %v498 = vunpack.c.h.b16 %v286
      %v499 = vunpack.c.l.b16 %v287
      %v500 = vunpack.c.h.b16 %v287
      %v501 = vunpack.c.l.b16 %v288
      %v502 = vunpack.c.h.b16 %v288
      %v503 = vunpack.c.l.b16 %v289
      %v504 = vunpack.c.h.b16 %v289
      %v505 = vunpack.c.l.b16 %v290
      %v506 = vunpack.c.h.b16 %v290
      %v507 = vunpack.c.l.b16 %v291
      %v508 = vunpack.c.h.b16 %v291
      %v509 = vunpack.c.l.b16 %v292
      %v510 = vunpack.c.h.b16 %v292
      %v511 = vpack.c.b16 %v385, %v383
      %v512 = vpack.c.b16 %v386, %v384
      %v513 = vpack.c.b16 %v389, %v387
      %v514 = vpack.c.b16 %v390, %v388
      %v515 = vpack.c.b16 %v393, %v391
      %v516 = vpack.c.b16 %v394, %v392
      %v517 = vpack.c.b16 %v397, %v395
      %v518 = vpack.c.b16 %v398, %v396
      %v519 = vpack.c.b16 %v401, %v399
      %v520 = vpack.c.b16 %v402, %v400
      %v521 = vpack.c.b16 %v405, %v403
      %v522 = vpack.c.b16 %v406, %v404
      %v523 = vpack.c.b16 %v409, %v407
      %v524 = vpack.c.b16 %v410, %v408
      %v525 = vpack.c.b16 %v413, %v411
      %v526 = vpack.c.b16 %v414, %v412
      %v527 = vpack.c.b16 %v417, %v415
      %v528 = vpack.c.b16 %v418, %v416
      %v529 = vpack.c.b16 %v421, %v419
      %v530 = vpack.c.b16 %v422, %v420
      %v531 = vpack.c.b16 %v425, %v423
      %v532 = vpack.c.b16 %v426, %v424
      %v533 = vpack.c.b16 %v429, %v427
      %v534 = vpack.c.b16 %v430, %v428
      %v535 = vpack.c.b16 %v433, %v431
      %v536 = vpack.c.b16 %v434, %v432
      %v537 = vpack.c.b16 %v437, %v435
      %v538 = vpack.c.b16 %v438, %v436
      %v539 = vpack.c.b16 %v441, %v439
      %v540 = vpack.c.b16 %v442, %v440
      %v541 = vpack.c.b16 %v445, %v443
      %v542 = vpack.c.b16 %v446, %v444
      %v543 = vpack.c.b16 %v449, %v447
      %v544 = vpack.c.b16 %v450, %v448
      %v545 = vpack.c.b16 %v453, %v451
      %v546 = vpack.c.b16 %v454, %v452
      %v547 = vpack.c.b16 %v457, %v455
      %v548 = vpack.c.b16 %v458, %v456
      %v549 = vpack.c.b16 %v461, %v459
      %v550 = vpack.c.b16 %v462, %v460
      %v551 = vpack.c.b16 %v465, %v463
      %v552 = vpack.c.b16 %v466, %v464
      %v553 = vpack.c.b16 %v469, %v467
      %v554 = vpack.c.b16 %v470, %v468
      %v555 = vpack.c.b16 %v473, %v471
      %v556 = vpack.c.b16 %v474, %v472
      %v557 = vpack.c.b16 %v477, %v475
      %v558 = vpack.c.b16 %v478, %v476
      %v559 = vpack.c.b16 %v481, %v479
      %v560 = vpack.c.b16 %v482, %v480
      %v561 = vpack.c.b16 %v485, %v483
      %v562 = vpack.c.b16 %v486, %v484
      %v563 = vpack.c.b16 %v489, %v487
      %v564 = vpack.c.b16 %v490, %v488
      %v565 = vpack.c.b16 %v493, %v491
      %v566 = vpack.c.b16 %v494, %v492
      %v567 = vpack.c.b16 %v497, %v495
      %v568 = vpack.c.b16 %v498, %v496
      %v569 = vpack.c.b16 %v501, %v499
      %v570 = vpack.c.b16 %v502, %v500
      %v571 = vpack.c.b16 %v505, %v503
      %v572 = vpack.c.b16 %v506, %v504
      %v573 = vpack.c.b16 %v509, %v507
      %v574 = vpack.c.b16 %v510, %v508
      %v626 = vunpack.c.l.b16 %v293
      %v627 = vunpack.c.l.b16 %v294
      %v628 = vunpack.c.l.b16 %v295
      %v629 = vunpack.c.l.b16 %v296
      %v630 = vunpack.c.l.b16 %v297
      %v631 = vunpack.c.l.b16 %v298
      %v632 = vunpack.c.l.b16 %v299
      %v633 = vunpack.c.l.b16 %v300
      %v634 = vunpack.c.l.b16 %v301
      %v635 = vunpack.c.l.b16 %v302
      %v636 = vunpack.c.l.b16 %v303
      %v637 = vunpack.c.l.b16 %v304
      %v638 = vunpack.c.l.b16 %v305
      %v639 = vunpack.c.l.b16 %v306
      %v640 = vunpack.c.l.b16 %v307
      %v641 = vunpack.c.l.b16 %v308
      %v642 = vunpack.c.l.b16 %v309
      %v643 = vunpack.c.l.b16 %v310
      %v644 = vunpack.c.l.b16 %v311
      %v645 = vpack.c.b16 %v627, %v626
      %v646 = vpack.c.b16 %v629, %v628
      %v647 = vpack.c.b16 %v631, %v630
      %v648 = vpack.c.b16 %v633, %v632
      %v649 = vpack.c.b16 %v635, %v634
      %v650 = vpack.c.b16 %v637, %v636
      %v651 = vpack.c.b16 %v639, %v638
      %v652 = vpack.c.b16 %v641, %v640
      %v653 = vpack.c.b16 %v643, %v642
      %v654 = vpack.c.b16 %v644, %v644
      %vm664 = vcmask 154624
      %v666 = vsel %vm664, %v512, 0
      %v669 = vsel %vm664, %v514, 0
      %v672 = vsel %vm664, %v516, 0
      %v675 = vsel %vm664, %v518, 0
      %v678 = vsel %vm664, %v520, 0
      %v681 = vsel %vm664, %v522, 0
      %v684 = vsel %vm664, %v524, 0
      %v687 = vsel %vm664, %v526, 0
      %v690 = vsel %vm664, %v528, 0
      %v693 = vsel %vm664, %v530, 0
      %v696 = vsel %vm664, %v532, 0
      %v699 = vsel %vm664, %v534, 0
      %v702 = vsel %vm664, %v536, 0
      %v705 = vsel %vm664, %v538, 0
      %v708 = vsel %vm664, %v540, 0
      %v711 = vsel %vm664, %v542, 0
      %v714 = vsel %vm664, %v544, 0
      %v717 = vsel %vm664, %v546, 0
      %v720 = vsel %vm664, %v548, 0
      %v723 = vsel %vm664, %v550, 0
      %v726 = vsel %vm664, %v552, 0
      %v729 = vsel %vm664, %v554, 0
      %v732 = vsel %vm664, %v556, 0
      %v735 = vsel %vm664, %v558, 0
      %v738 = vsel %vm664, %v560, 0
      %v741 = vsel %vm664, %v562, 0
      %v744 = vsel %vm664, %v564, 0
      %v747 = vsel %vm664, %v566, 0
      %v750 = vsel %vm664, %v568, 0
      %v753 = vsel %vm664, %v570, 0
      %v756 = vsel %vm664, %v572, 0
      %v759 = vsel %vm664, %v574, 0
      %vm761 = vcmask 1040384
      %vm762 = vcmask 1041408
      %v763 = vsel %vm761, 4294967295, 65535
      %v764 = vsel %vm762, %v763, 0
      %v766 = vand.u32 %v654, %v764
      %768 = vmatprep.subr.bf16.mxu0 0
      %769 = vmatpush1.bf16.msra.mxu0 %v652
      %770 = vmatprep.subr.bf16.mxu0 0
      %771 = vmatpush1.bf16.msra.mxu0 %v651
      %772 = vmatprep.subr.bf16.mxu0 0
      %773 = vmatpush1.bf16.msra.mxu0 %v650
      %774 = vmatprep.subr.bf16.mxu0 0
      %775 = vmatpush1.bf16.msra.mxu0 %v649
      %776 = vmatprep.subr.bf16.mxu0 0
      %777 = vmatpush1.bf16.msra.mxu0 %v648
      %778 = vmatprep.subr.bf16.mxu0 0
      %779 = vmatpush1.bf16.msra.mxu0 %v647
      %780 = vmatprep.subr.bf16.mxu0 0
      %781 = vmatpush1.bf16.msra.mxu0 %v646
      %782 = vmatprep.subr.bf16.mxu0 0
      %783 = vmatpush1.bf16.msra.mxu0 %v645
      %784 = vmatprep.subr.bf16.mxu0 0
      %785 = vmatpush2.bf16.msra.mxu0 0
      %786 = vmatprep.subr.bf16.mxu0 0
      %787 = vmatpush2.bf16.msra.mxu0 0
      %788 = vmatprep.subr.bf16.mxu0 0
      %789 = vmatpush2.bf16.msra.mxu0 0
      %790 = vmatprep.subr.bf16.mxu0 0
      %791 = vmatpush2.bf16.msra.mxu0 0
      %792 = vmatprep.subr.bf16.mxu0 0
      %793 = vmatpush2.bf16.msra.mxu0 0
      %794 = vmatprep.subr.bf16.mxu0 0
      %795 = vmatpush2.bf16.msra.mxu0 0
      %796 = vmatprep.subr.bf16.mxu0 0
      %797 = vmatpush2.bf16.msra.mxu0 %v766
      %798 = vmatprep.subr.bf16.mxu0 0
      %799 = vmatpush2.bf16.msra.mxu0 %v653
      %800 = vmatprep.mubr.bf16.mxu0 %v666
      %801 = vmatmul.mubr.bf16.gmra.mxu0 %v511
      %v802 = vpop.f32.mrf.mxu0
      %v803 = vadd.f32 %v317, %v802
      %v804 = vpop.f32.mrf.mxu0
      %v805 = vpop.f32.mrf.mxu0
      %v806 = vadd.f32 %v317, %v805
      %v807 = vpop.f32.mrf.mxu0
      %808 = vmatprep.mubr.bf16.mxu0 %v669
      %809 = vmatmul.mubr.bf16.gmra.mxu0 %v513
      %v810 = vpop.f32.mrf.mxu0
      %v811 = vadd.f32 %v317, %v810
      %v812 = vpop.f32.mrf.mxu0
      %v813 = vpop.f32.mrf.mxu0
      %v814 = vadd.f32 %v317, %v813
      %v815 = vpop.f32.mrf.mxu0
      %816 = vmatprep.mubr.bf16.mxu0 %v672
      %817 = vmatmul.mubr.bf16.gmra.mxu0 %v515
      %v818 = vpop.f32.mrf.mxu0
      %v819 = vadd.f32 %v317, %v818
      %v820 = vpop.f32.mrf.mxu0
      %v821 = vpop.f32.mrf.mxu0
      %v822 = vadd.f32 %v317, %v821
      %v823 = vpop.f32.mrf.mxu0
      %824 = vmatprep.mubr.bf16.mxu0 %v675
      %825 = vmatmul.mubr.bf16.gmra.mxu0 %v517
      %v826 = vpop.f32.mrf.mxu0
      %v827 = vadd.f32 %v317, %v826
      %v828 = vpop.f32.mrf.mxu0
      %v829 = vpop.f32.mrf.mxu0
      %v830 = vadd.f32 %v317, %v829
      %v831 = vpop.f32.mrf.mxu0
      %832 = vmatprep.mubr.bf16.mxu0 %v678
      %833 = vmatmul.mubr.bf16.gmra.mxu0 %v519
      %v834 = vpop.f32.mrf.mxu0
      %v835 = vadd.f32 %v317, %v834
      %v836 = vpop.f32.mrf.mxu0
      %v837 = vpop.f32.mrf.mxu0
      %v838 = vadd.f32 %v317, %v837
      %v839 = vpop.f32.mrf.mxu0
      %840 = vmatprep.mubr.bf16.mxu0 %v681
      %841 = vmatmul.mubr.bf16.gmra.mxu0 %v521
      %v842 = vpop.f32.mrf.mxu0
      %v843 = vadd.f32 %v317, %v842
      %v844 = vpop.f32.mrf.mxu0
      %v845 = vpop.f32.mrf.mxu0
      %v846 = vadd.f32 %v317, %v845
      %v847 = vpop.f32.mrf.mxu0
      %848 = vmatprep.mubr.bf16.mxu0 %v684
      %849 = vmatmul.mubr.bf16.gmra.mxu0 %v523
      %v850 = vpop.f32.mrf.mxu0
      %v851 = vadd.f32 %v317, %v850
      %v852 = vpop.f32.mrf.mxu0
      %v853 = vpop.f32.mrf.mxu0
      %v854 = vadd.f32 %v317, %v853
      %v855 = vpop.f32.mrf.mxu0
      %856 = vmatprep.mubr.bf16.mxu0 %v687
      %857 = vmatmul.mubr.bf16.gmra.mxu0 %v525
      %v858 = vpop.f32.mrf.mxu0
      %v859 = vadd.f32 %v317, %v858
      %v860 = vpop.f32.mrf.mxu0
      %v861 = vpop.f32.mrf.mxu0
      %v862 = vadd.f32 %v317, %v861
      %v863 = vpop.f32.mrf.mxu0
      %864 = vmatprep.mubr.bf16.mxu0 %v690
      %865 = vmatmul.mubr.bf16.gmra.mxu0 %v527
      %v866 = vpop.f32.mrf.mxu0
      %v867 = vadd.f32 %v317, %v866
      %v868 = vpop.f32.mrf.mxu0
      %v869 = vpop.f32.mrf.mxu0
      %v870 = vadd.f32 %v317, %v869
      %v871 = vpop.f32.mrf.mxu0
      %872 = vmatprep.mubr.bf16.mxu0 %v693
      %873 = vmatmul.mubr.bf16.gmra.mxu0 %v529
      %v874 = vpop.f32.mrf.mxu0
      %v875 = vadd.f32 %v317, %v874
      %v876 = vpop.f32.mrf.mxu0
      %v877 = vpop.f32.mrf.mxu0
      %v878 = vadd.f32 %v317, %v877
      %v879 = vpop.f32.mrf.mxu0
      %880 = vmatprep.mubr.bf16.mxu0 %v696
      %881 = vmatmul.mubr.bf16.gmra.mxu0 %v531
      %v882 = vpop.f32.mrf.mxu0
      %v883 = vadd.f32 %v317, %v882
      %v884 = vpop.f32.mrf.mxu0
      %v885 = vpop.f32.mrf.mxu0
      %v886 = vadd.f32 %v317, %v885
      %v887 = vpop.f32.mrf.mxu0
      %888 = vmatprep.mubr.bf16.mxu0 %v699
      %889 = vmatmul.mubr.bf16.gmra.mxu0 %v533
      %v890 = vpop.f32.mrf.mxu0
      %v891 = vadd.f32 %v317, %v890
      %v892 = vpop.f32.mrf.mxu0
      %v893 = vpop.f32.mrf.mxu0
      %v894 = vadd.f32 %v317, %v893
      %v895 = vpop.f32.mrf.mxu0
      %896 = vmatprep.mubr.bf16.mxu0 %v702
      %897 = vmatmul.mubr.bf16.gmra.mxu0 %v535
      %v898 = vpop.f32.mrf.mxu0
      %v899 = vadd.f32 %v317, %v898
      %v900 = vpop.f32.mrf.mxu0
      %v901 = vpop.f32.mrf.mxu0
      %v902 = vadd.f32 %v317, %v901
      %v903 = vpop.f32.mrf.mxu0
      %904 = vmatprep.mubr.bf16.mxu0 %v705
      %905 = vmatmul.mubr.bf16.gmra.mxu0 %v537
      %v906 = vpop.f32.mrf.mxu0
      %v907 = vadd.f32 %v317, %v906
      %v908 = vpop.f32.mrf.mxu0
      %v909 = vpop.f32.mrf.mxu0
      %v910 = vadd.f32 %v317, %v909
      %v911 = vpop.f32.mrf.mxu0
      %912 = vmatprep.mubr.bf16.mxu0 %v708
      %913 = vmatmul.mubr.bf16.gmra.mxu0 %v539
      %v914 = vpop.f32.mrf.mxu0
      %v915 = vadd.f32 %v317, %v914
      %v916 = vpop.f32.mrf.mxu0
      %v917 = vpop.f32.mrf.mxu0
      %v918 = vadd.f32 %v317, %v917
      %v919 = vpop.f32.mrf.mxu0
      %920 = vmatprep.mubr.bf16.mxu0 %v711
      %921 = vmatmul.mubr.bf16.gmra.mxu0 %v541
      %v922 = vpop.f32.mrf.mxu0
      %v923 = vadd.f32 %v317, %v922
      %v924 = vpop.f32.mrf.mxu0
      %v925 = vpop.f32.mrf.mxu0
      %v926 = vadd.f32 %v317, %v925
      %v927 = vpop.f32.mrf.mxu0
      %928 = vmatprep.mubr.bf16.mxu0 %v714
      %929 = vmatmul.mubr.bf16.gmra.mxu0 %v543
      %v930 = vpop.f32.mrf.mxu0
      %v931 = vadd.f32 %v317, %v930
      %v932 = vpop.f32.mrf.mxu0
      %v933 = vpop.f32.mrf.mxu0
      %v934 = vadd.f32 %v317, %v933
      %v935 = vpop.f32.mrf.mxu0
      %936 = vmatprep.mubr.bf16.mxu0 %v717
      %937 = vmatmul.mubr.bf16.gmra.mxu0 %v545
      %v938 = vpop.f32.mrf.mxu0
      %v939 = vadd.f32 %v317, %v938
      %v940 = vpop.f32.mrf.mxu0
      %v941 = vpop.f32.mrf.mxu0
      %v942 = vadd.f32 %v317, %v941
      %v943 = vpop.f32.mrf.mxu0
      %944 = vmatprep.mubr.bf16.mxu0 %v720
      %945 = vmatmul.mubr.bf16.gmra.mxu0 %v547
      %v946 = vpop.f32.mrf.mxu0
      %v947 = vadd.f32 %v317, %v946
      %v948 = vpop.f32.mrf.mxu0
      %v949 = vpop.f32.mrf.mxu0
      %v950 = vadd.f32 %v317, %v949
      %v951 = vpop.f32.mrf.mxu0
      %952 = vmatprep.mubr.bf16.mxu0 %v723
      %953 = vmatmul.mubr.bf16.gmra.mxu0 %v549
      %v954 = vpop.f32.mrf.mxu0
      %v955 = vadd.f32 %v317, %v954
      %v956 = vpop.f32.mrf.mxu0
      %v957 = vpop.f32.mrf.mxu0
      %v958 = vadd.f32 %v317, %v957
      %v959 = vpop.f32.mrf.mxu0
      %960 = vmatprep.mubr.bf16.mxu0 %v726
      %961 = vmatmul.mubr.bf16.gmra.mxu0 %v551
      %v962 = vpop.f32.mrf.mxu0
      %v963 = vadd.f32 %v317, %v962
      %v964 = vpop.f32.mrf.mxu0
      %v965 = vpop.f32.mrf.mxu0
      %v966 = vadd.f32 %v317, %v965
      %v967 = vpop.f32.mrf.mxu0
      %968 = vmatprep.mubr.bf16.mxu0 %v729
      %969 = vmatmul.mubr.bf16.gmra.mxu0 %v553
      %v970 = vpop.f32.mrf.mxu0
      %v971 = vadd.f32 %v317, %v970
      %v972 = vpop.f32.mrf.mxu0
      %v973 = vpop.f32.mrf.mxu0
      %v974 = vadd.f32 %v317, %v973
      %v975 = vpop.f32.mrf.mxu0
      %976 = vmatprep.mubr.bf16.mxu0 %v732
      %977 = vmatmul.mubr.bf16.gmra.mxu0 %v555
      %v978 = vpop.f32.mrf.mxu0
      %v979 = vadd.f32 %v317, %v978
      %v980 = vpop.f32.mrf.mxu0
      %v981 = vpop.f32.mrf.mxu0
      %v982 = vadd.f32 %v317, %v981
      %v983 = vpop.f32.mrf.mxu0
      %984 = vmatprep.mubr.bf16.mxu0 %v735
      %985 = vmatmul.mubr.bf16.gmra.mxu0 %v557
      %v986 = vpop.f32.mrf.mxu0
      %v987 = vadd.f32 %v317, %v986
      %v988 = vpop.f32.mrf.mxu0
      %v989 = vpop.f32.mrf.mxu0
      %v990 = vadd.f32 %v317, %v989
      %v991 = vpop.f32.mrf.mxu0
      %992 = vmatprep.mubr.bf16.mxu0 %v738
      %993 = vmatmul.mubr.bf16.gmra.mxu0 %v559
      %v994 = vpop.f32.mrf.mxu0
      %v995 = vadd.f32 %v317, %v994
      %v996 = vpop.f32.mrf.mxu0
      %v997 = vpop.f32.mrf.mxu0
      %v998 = vadd.f32 %v317, %v997
      %v999 = vpop.f32.mrf.mxu0
      %1000 = vmatprep.mubr.bf16.mxu0 %v741
      %1001 = vmatmul.mubr.bf16.gmra.mxu0 %v561
      %v1002 = vpop.f32.mrf.mxu0
      %v1003 = vadd.f32 %v317, %v1002
      %v1004 = vpop.f32.mrf.mxu0
      %v1005 = vpop.f32.mrf.mxu0
      %v1006 = vadd.f32 %v317, %v1005
      %v1007 = vpop.f32.mrf.mxu0
      %1008 = vmatprep.mubr.bf16.mxu0 %v744
      %1009 = vmatmul.mubr.bf16.gmra.mxu0 %v563
      %v1010 = vpop.f32.mrf.mxu0
      %v1011 = vadd.f32 %v317, %v1010
      %v1012 = vpop.f32.mrf.mxu0
      %v1013 = vpop.f32.mrf.mxu0
      %v1014 = vadd.f32 %v317, %v1013
      %v1015 = vpop.f32.mrf.mxu0
      %1016 = vmatprep.mubr.bf16.mxu0 %v747
      %1017 = vmatmul.mubr.bf16.gmra.mxu0 %v565
      %v1018 = vpop.f32.mrf.mxu0
      %v1019 = vadd.f32 %v317, %v1018
      %v1020 = vpop.f32.mrf.mxu0
      %v1021 = vpop.f32.mrf.mxu0
      %v1022 = vadd.f32 %v317, %v1021
      %v1023 = vpop.f32.mrf.mxu0
      %1024 = vmatprep.mubr.bf16.mxu0 %v750
      %1025 = vmatmul.mubr.bf16.gmra.mxu0 %v567
      %v1026 = vpop.f32.mrf.mxu0
      %v1027 = vadd.f32 %v317, %v1026
      %v1028 = vpop.f32.mrf.mxu0
      %v1029 = vpop.f32.mrf.mxu0
      %v1030 = vadd.f32 %v317, %v1029
      %v1031 = vpop.f32.mrf.mxu0
      %1032 = vmatprep.mubr.bf16.mxu0 %v753
      %1033 = vmatmul.mubr.bf16.gmra.mxu0 %v569
      %v1034 = vpop.f32.mrf.mxu0
      %v1035 = vadd.f32 %v317, %v1034
      %v1036 = vpop.f32.mrf.mxu0
      %v1037 = vpop.f32.mrf.mxu0
      %v1038 = vadd.f32 %v317, %v1037
      %v1039 = vpop.f32.mrf.mxu0
      %1040 = vmatprep.mubr.bf16.mxu0 %v756
      %1041 = vmatmul.mubr.bf16.gmra.mxu0 %v571
      %v1042 = vpop.f32.mrf.mxu0
      %v1043 = vadd.f32 %v317, %v1042
      %v1044 = vpop.f32.mrf.mxu0
      %v1045 = vpop.f32.mrf.mxu0
      %v1046 = vadd.f32 %v317, %v1045
      %v1047 = vpop.f32.mrf.mxu0
      %1048 = vmatprep.mubr.bf16.mxu0 %v759
      %1049 = vmatmul.mubr.bf16.gmra.mxu0 %v573
      %v1050 = vpop.f32.mrf.mxu0
      %v1051 = vadd.f32 %v317, %v1050
      %v1052 = vpop.f32.mrf.mxu0
      %v1053 = vpop.f32.mrf.mxu0
      %v1054 = vadd.f32 %v317, %v1053
      %v1055 = vpop.f32.mrf.mxu0
      %1056 = vdwg.mxu0
      %v1057 = vmax.f32 %v803, 0.0
      %v1058 = vmax.f32 %v806, 0.0
      %v1059 = vmax.f32 %v811, 0.0
      %v1060 = vmax.f32 %v814, 0.0
      %v1061 = vmax.f32 %v819, 0.0
      %v1062 = vmax.f32 %v822, 0.0
      %v1063 = vmax.f32 %v827, 0.0
      %v1064 = vmax.f32 %v830, 0.0
      %v1065 = vmax.f32 %v835, 0.0
      %v1066 = vmax.f32 %v838, 0.0
      %v1067 = vmax.f32 %v843, 0.0
      %v1068 = vmax.f32 %v846, 0.0
      %v1069 = vmax.f32 %v851, 0.0
      %v1070 = vmax.f32 %v854, 0.0
      %v1071 = vmax.f32 %v859, 0.0
      %v1072 = vmax.f32 %v862, 0.0
      %v1073 = vmax.f32 %v867, 0.0
      %v1074 = vmax.f32 %v870, 0.0
      %v1075 = vmax.f32 %v875, 0.0
      %v1076 = vmax.f32 %v878, 0.0
      %v1077 = vmax.f32 %v883, 0.0
      %v1078 = vmax.f32 %v886, 0.0
      %v1079 = vmax.f32 %v891, 0.0
      %v1080 = vmax.f32 %v894, 0.0
      %v1081 = vmax.f32 %v899, 0.0
      %v1082 = vmax.f32 %v902, 0.0
      %v1083 = vmax.f32 %v907, 0.0
      %v1084 = vmax.f32 %v910, 0.0
      %v1085 = vmax.f32 %v915, 0.0
      %v1086 = vmax.f32 %v918, 0.0
      %v1087 = vmax.f32 %v923, 0.0
      %v1088 = vmax.f32 %v926, 0.0
      %v1089 = vmax.f32 %v931, 0.0
      %v1090 = vmax.f32 %v934, 0.0
      %v1091 = vmax.f32 %v939, 0.0
      %v1092 = vmax.f32 %v942, 0.0
      %v1093 = vmax.f32 %v947, 0.0
      %v1094 = vmax.f32 %v950, 0.0
      %v1095 = vmax.f32 %v955, 0.0
      %v1096 = vmax.f32 %v958, 0.0
      %v1097 = vmax.f32 %v963, 0.0
      %v1098 = vmax.f32 %v966, 0.0
      %v1099 = vmax.f32 %v971, 0.0
      %v1100 = vmax.f32 %v974, 0.0
      %v1101 = vmax.f32 %v979, 0.0
      %v1102 = vmax.f32 %v982, 0.0
      %v1103 = vmax.f32 %v987, 0.0
      %v1104 = vmax.f32 %v990, 0.0
      %v1105 = vmax.f32 %v995, 0.0
      %v1106 = vmax.f32 %v998, 0.0
      %v1107 = vmax.f32 %v1003, 0.0
      %v1108 = vmax.f32 %v1006, 0.0
      %v1109 = vmax.f32 %v1011, 0.0
      %v1110 = vmax.f32 %v1014, 0.0
      %v1111 = vmax.f32 %v1019, 0.0
      %v1112 = vmax.f32 %v1022, 0.0
      %v1113 = vmax.f32 %v1027, 0.0
      %v1114 = vmax.f32 %v1030, 0.0
      %v1115 = vmax.f32 %v1035, 0.0
      %v1116 = vmax.f32 %v1038, 0.0
      %v1117 = vmax.f32 %v1043, 0.0
      %v1118 = vmax.f32 %v1046, 0.0
      %v1119 = vmax.f32 %v1051, 0.0
      %v1120 = vmax.f32 %v1054, 0.0
      %v1121 = vpack.c.bf16 %v1058, %v1057
      %v1122 = vpack.c.bf16 %v1060, %v1059
      %v1123 = vpack.c.bf16 %v1062, %v1061
      %v1124 = vpack.c.bf16 %v1064, %v1063
      %v1125 = vpack.c.bf16 %v1066, %v1065
      %v1126 = vpack.c.bf16 %v1068, %v1067
      %v1127 = vpack.c.bf16 %v1070, %v1069
      %v1128 = vpack.c.bf16 %v1072, %v1071
      %v1129 = vpack.c.bf16 %v1074, %v1073
      %v1130 = vpack.c.bf16 %v1076, %v1075
      %v1131 = vpack.c.bf16 %v1078, %v1077
      %v1132 = vpack.c.bf16 %v1080, %v1079
      %v1133 = vpack.c.bf16 %v1082, %v1081
      %v1134 = vpack.c.bf16 %v1084, %v1083
      %v1135 = vpack.c.bf16 %v1086, %v1085
      %v1136 = vpack.c.bf16 %v1088, %v1087
      %v1137 = vpack.c.bf16 %v1090, %v1089
      %v1138 = vpack.c.bf16 %v1092, %v1091
      %v1139 = vpack.c.bf16 %v1094, %v1093
      %v1140 = vpack.c.bf16 %v1096, %v1095
      %v1141 = vpack.c.bf16 %v1098, %v1097
      %v1142 = vpack.c.bf16 %v1100, %v1099
      %v1143 = vpack.c.bf16 %v1102, %v1101
      %v1144 = vpack.c.bf16 %v1104, %v1103
      %v1145 = vpack.c.bf16 %v1106, %v1105
      %v1146 = vpack.c.bf16 %v1108, %v1107
      %v1147 = vpack.c.bf16 %v1110, %v1109
      %v1148 = vpack.c.bf16 %v1112, %v1111
      %v1149 = vpack.c.bf16 %v1114, %v1113
      %v1150 = vpack.c.bf16 %v1116, %v1115
      %v1151 = vpack.c.bf16 %v1118, %v1117
      %v1152 = vpack.c.bf16 %v1120, %v1119
      %v1185 = vunpack.c.l.b16 %v1121
      %v1186 = vunpack.c.h.b16 %v1121
      %v1187 = vunpack.c.l.b16 %v1122
      %v1188 = vunpack.c.h.b16 %v1122
      %v1189 = vunpack.c.l.b16 %v1123
      %v1190 = vunpack.c.h.b16 %v1123
      %v1191 = vunpack.c.l.b16 %v1124
      %v1192 = vunpack.c.h.b16 %v1124
      %v1193 = vunpack.c.l.b16 %v1125
      %v1194 = vunpack.c.h.b16 %v1125
      %v1195 = vunpack.c.l.b16 %v1126
      %v1196 = vunpack.c.h.b16 %v1126
      %v1197 = vunpack.c.l.b16 %v1127
      %v1198 = vunpack.c.h.b16 %v1127
      %v1199 = vunpack.c.l.b16 %v1128
      %v1200 = vunpack.c.h.b16 %v1128
      %v1201 = vunpack.c.l.b16 %v1129
      %v1202 = vunpack.c.h.b16 %v1129
      %v1203 = vunpack.c.l.b16 %v1130
      %v1204 = vunpack.c.h.b16 %v1130
      %v1205 = vunpack.c.l.b16 %v1131
      %v1206 = vunpack.c.h.b16 %v1131
      %v1207 = vunpack.c.l.b16 %v1132
      %v1208 = vunpack.c.h.b16 %v1132
      %v1209 = vunpack.c.l.b16 %v1133
      %v1210 = vunpack.c.h.b16 %v1133
      %v1211 = vunpack.c.l.b16 %v1134
      %v1212 = vunpack.c.h.b16 %v1134
      %v1213 = vunpack.c.l.b16 %v1135
      %v1214 = vunpack.c.h.b16 %v1135
      %v1215 = vunpack.c.l.b16 %v1136
      %v1216 = vunpack.c.h.b16 %v1136
      %v1217 = vunpack.c.l.b16 %v1137
      %v1218 = vunpack.c.h.b16 %v1137
      %v1219 = vunpack.c.l.b16 %v1138
      %v1220 = vunpack.c.h.b16 %v1138
      %v1221 = vunpack.c.l.b16 %v1139
      %v1222 = vunpack.c.h.b16 %v1139
      %v1223 = vunpack.c.l.b16 %v1140
      %v1224 = vunpack.c.h.b16 %v1140
      %v1225 = vunpack.c.l.b16 %v1141
      %v1226 = vunpack.c.h.b16 %v1141
      %v1227 = vunpack.c.l.b16 %v1142
      %v1228 = vunpack.c.h.b16 %v1142
      %v1229 = vunpack.c.l.b16 %v1143
      %v1230 = vunpack.c.h.b16 %v1143
      %v1231 = vunpack.c.l.b16 %v1144
      %v1232 = vunpack.c.h.b16 %v1144
      %v1233 = vunpack.c.l.b16 %v1145
      %v1234 = vunpack.c.h.b16 %v1145
      %v1235 = vunpack.c.l.b16 %v1146
      %v1236 = vunpack.c.h.b16 %v1146
      %v1237 = vunpack.c.l.b16 %v1147
      %v1238 = vunpack.c.h.b16 %v1147
      %v1239 = vunpack.c.l.b16 %v1148
      %v1240 = vunpack.c.h.b16 %v1148
      %v1241 = vunpack.c.l.b16 %v1149
      %v1242 = vunpack.c.h.b16 %v1149
      %v1243 = vunpack.c.l.b16 %v1150
      %v1244 = vunpack.c.h.b16 %v1150
      %v1245 = vunpack.c.l.b16 %v1151
      %v1246 = vunpack.c.h.b16 %v1151
      %v1247 = vunpack.c.l.b16 %v1152
      %v1248 = vunpack.c.h.b16 %v1152
      %v1249 = vpack.c.b16 %v1185, %v1185
      %v1250 = vpack.c.b16 %v1186, %v1186
      %v1251 = vpack.c.b16 %v1187, %v1187
      %v1252 = vpack.c.b16 %v1188, %v1188
      %v1253 = vpack.c.b16 %v1189, %v1189
      %v1254 = vpack.c.b16 %v1190, %v1190
      %v1255 = vpack.c.b16 %v1191, %v1191
      %v1256 = vpack.c.b16 %v1192, %v1192
      %v1257 = vpack.c.b16 %v1193, %v1193
      %v1258 = vpack.c.b16 %v1194, %v1194
      %v1259 = vpack.c.b16 %v1195, %v1195
      %v1260 = vpack.c.b16 %v1196, %v1196
      %v1261 = vpack.c.b16 %v1197, %v1197
      %v1262 = vpack.c.b16 %v1198, %v1198
      %v1263 = vpack.c.b16 %v1199, %v1199
      %v1264 = vpack.c.b16 %v1200, %v1200
      %v1265 = vpack.c.b16 %v1201, %v1201
      %v1266 = vpack.c.b16 %v1202, %v1202
      %v1267 = vpack.c.b16 %v1203, %v1203
      %v1268 = vpack.c.b16 %v1204, %v1204
      %v1269 = vpack.c.b16 %v1205, %v1205
      %v1270 = vpack.c.b16 %v1206, %v1206
      %v1271 = vpack.c.b16 %v1207, %v1207
      %v1272 = vpack.c.b16 %v1208, %v1208
      %v1273 = vpack.c.b16 %v1209, %v1209
      %v1274 = vpack.c.b16 %v1210, %v1210
      %v1275 = vpack.c.b16 %v1211, %v1211
      %v1276 = vpack.c.b16 %v1212, %v1212
      %v1277 = vpack.c.b16 %v1213, %v1213
      %v1278 = vpack.c.b16 %v1214, %v1214
      %v1279 = vpack.c.b16 %v1215, %v1215
      %v1280 = vpack.c.b16 %v1216, %v1216
      %v1281 = vpack.c.b16 %v1217, %v1217
      %v1282 = vpack.c.b16 %v1218, %v1218
      %v1283 = vpack.c.b16 %v1219, %v1219
      %v1284 = vpack.c.b16 %v1220, %v1220
      %v1285 = vpack.c.b16 %v1221, %v1221
      %v1286 = vpack.c.b16 %v1222, %v1222
      %v1287 = vpack.c.b16 %v1223, %v1223
      %v1288 = vpack.c.b16 %v1224, %v1224
      %v1289 = vpack.c.b16 %v1225, %v1225
      %v1290 = vpack.c.b16 %v1226, %v1226
      %v1291 = vpack.c.b16 %v1227, %v1227
      %v1292 = vpack.c.b16 %v1228, %v1228
      %v1293 = vpack.c.b16 %v1229, %v1229
      %v1294 = vpack.c.b16 %v1230, %v1230
      %v1295 = vpack.c.b16 %v1231, %v1231
      %v1296 = vpack.c.b16 %v1232, %v1232
      %v1297 = vpack.c.b16 %v1233, %v1233
      %v1298 = vpack.c.b16 %v1234, %v1234
      %v1299 = vpack.c.b16 %v1235, %v1235
      %v1300 = vpack.c.b16 %v1236, %v1236
      %v1301 = vpack.c.b16 %v1237, %v1237
      %v1302 = vpack.c.b16 %v1238, %v1238
      %v1303 = vpack.c.b16 %v1239, %v1239
      %v1304 = vpack.c.b16 %v1240, %v1240
      %v1305 = vpack.c.b16 %v1241, %v1241
      %v1306 = vpack.c.b16 %v1242, %v1242
      %v1307 = vpack.c.b16 %v1243, %v1243
      %v1308 = vpack.c.b16 %v1244, %v1244
      %v1309 = vpack.c.b16 %v1245, %v1245
      %v1310 = vpack.c.b16 %v1246, %v1246
      %v1311 = vpack.c.b16 %v1247, %v1247
      %v1312 = vpack.c.b16 %v1248, %v1248
      %vm1377 = vcmask 519168
      %1378 = vst.msk [vmem:[%s226] sm:$0xf] %vm1377, %v1249
      %1379 = vst.msk [vmem:[%s226 + $0x4] sm:$0xf] %vm1377, %v1250
      %1380 = vst.msk [vmem:[%s226 + $0x8] sm:$0xf] %vm1377, %v1251
      %1381 = vst.msk [vmem:[%s226 + $0xc] sm:$0xf] %vm1377, %v1252
      %1382 = vst.msk [vmem:[%s226 + $0x10] sm:$0xf] %vm1377, %v1253
      %1383 = vst.msk [vmem:[%s226 + $0x14] sm:$0xf] %vm1377, %v1254
      %1384 = vst.msk [vmem:[%s226 + $0x18] sm:$0xf] %vm1377, %v1255
      %1385 = vst.msk [vmem:[%s226 + $0x1c] sm:$0xf] %vm1377, %v1256
      %1386 = vst.msk [vmem:[%s226 + $0x20] sm:$0xf] %vm1377, %v1257
      %1387 = vst.msk [vmem:[%s226 + $0x24] sm:$0xf] %vm1377, %v1258
      %1388 = vst.msk [vmem:[%s226 + $0x28] sm:$0xf] %vm1377, %v1259
      %1389 = vst.msk [vmem:[%s226 + $0x2c] sm:$0xf] %vm1377, %v1260
      %1390 = vst.msk [vmem:[%s226 + $0x30] sm:$0xf] %vm1377, %v1261
      %1391 = vst.msk [vmem:[%s226 + $0x34] sm:$0xf] %vm1377, %v1262
      %1392 = vst.msk [vmem:[%s226 + $0x38] sm:$0xf] %vm1377, %v1263
      %1393 = vst.msk [vmem:[%s226 + $0x3c] sm:$0xf] %vm1377, %v1264
      %1394 = vst.msk [vmem:[%s226 + $0x40] sm:$0xf] %vm1377, %v1265
      %1395 = vst.msk [vmem:[%s226 + $0x44] sm:$0xf] %vm1377, %v1266
      %1396 = vst.msk [vmem:[%s226 + $0x48] sm:$0xf] %vm1377, %v1267
      %1397 = vst.msk [vmem:[%s226 + $0x4c] sm:$0xf] %vm1377, %v1268
      %1398 = vst.msk [vmem:[%s226 + $0x50] sm:$0xf] %vm1377, %v1269
      %1399 = vst.msk [vmem:[%s226 + $0x54] sm:$0xf] %vm1377, %v1270
      %1400 = vst.msk [vmem:[%s226 + $0x58] sm:$0xf] %vm1377, %v1271
      %1401 = vst.msk [vmem:[%s226 + $0x5c] sm:$0xf] %vm1377, %v1272
      %1402 = vst.msk [vmem:[%s226 + $0x60] sm:$0xf] %vm1377, %v1273
      %1403 = vst.msk [vmem:[%s226 + $0x64] sm:$0xf] %vm1377, %v1274
      %1404 = vst.msk [vmem:[%s226 + $0x68] sm:$0xf] %vm1377, %v1275
      %1405 = vst.msk [vmem:[%s226 + $0x6c] sm:$0xf] %vm1377, %v1276
      %1406 = vst.msk [vmem:[%s226 + $0x70] sm:$0xf] %vm1377, %v1277
      %1407 = vst.msk [vmem:[%s226 + $0x74] sm:$0xf] %vm1377, %v1278
      %1408 = vst.msk [vmem:[%s226 + $0x78] sm:$0xf] %vm1377, %v1279
      %1409 = vst.msk [vmem:[%s226 + $0x7c] sm:$0xf] %vm1377, %v1280
      %1410 = vst.msk [vmem:[%s226 + $0x80] sm:$0xf] %vm1377, %v1281
      %1411 = vst.msk [vmem:[%s226 + $0x84] sm:$0xf] %vm1377, %v1282
      %1412 = vst.msk [vmem:[%s226 + $0x88] sm:$0xf] %vm1377, %v1283
      %1413 = vst.msk [vmem:[%s226 + $0x8c] sm:$0xf] %vm1377, %v1284
      %1414 = vst.msk [vmem:[%s226 + $0x90] sm:$0xf] %vm1377, %v1285
      %1415 = vst.msk [vmem:[%s226 + $0x94] sm:$0xf] %vm1377, %v1286
      %1416 = vst.msk [vmem:[%s226 + $0x98] sm:$0xf] %vm1377, %v1287
      %1417 = vst.msk [vmem:[%s226 + $0x9c] sm:$0xf] %vm1377, %v1288
      %1418 = vst.msk [vmem:[%s226 + $0xa0] sm:$0xf] %vm1377, %v1289
      %1419 = vst.msk [vmem:[%s226 + $0xa4] sm:$0xf] %vm1377, %v1290
      %1420 = vst.msk [vmem:[%s226 + $0xa8] sm:$0xf] %vm1377, %v1291
      %1421 = vst.msk [vmem:[%s226 + $0xac] sm:$0xf] %vm1377, %v1292
      %1422 = vst.msk [vmem:[%s226 + $0xb0] sm:$0xf] %vm1377, %v1293
      %1423 = vst.msk [vmem:[%s226 + $0xb4] sm:$0xf] %vm1377, %v1294
      %1424 = vst.msk [vmem:[%s226 + $0xb8] sm:$0xf] %vm1377, %v1295
      %1425 = vst.msk [vmem:[%s226 + $0xbc] sm:$0xf] %vm1377, %v1296
      %1426 = vst.msk [vmem:[%s226 + $0xc0] sm:$0xf] %vm1377, %v1297
      %1427 = vst.msk [vmem:[%s226 + $0xc4] sm:$0xf] %vm1377, %v1298
      %1428 = vst.msk [vmem:[%s226 + $0xc8] sm:$0xf] %vm1377, %v1299
      %1429 = vst.msk [vmem:[%s226 + $0xcc] sm:$0xf] %vm1377, %v1300
      %1430 = vst.msk [vmem:[%s226 + $0xd0] sm:$0xf] %vm1377, %v1301
      %1431 = vst.msk [vmem:[%s226 + $0xd4] sm:$0xf] %vm1377, %v1302
      %1432 = vst.msk [vmem:[%s226 + $0xd8] sm:$0xf] %vm1377, %v1303
      %1433 = vst.msk [vmem:[%s226 + $0xdc] sm:$0xf] %vm1377, %v1304
      %1434 = vst.msk [vmem:[%s226 + $0xe0] sm:$0xf] %vm1377, %v1305
      %1435 = vst.msk [vmem:[%s226 + $0xe4] sm:$0xf] %vm1377, %v1306
      %1436 = vst.msk [vmem:[%s226 + $0xe8] sm:$0xf] %vm1377, %v1307
      %1437 = vst.msk [vmem:[%s226 + $0xec] sm:$0xf] %vm1377, %v1308
      %1438 = vst.msk [vmem:[%s226 + $0xf0] sm:$0xf] %vm1377, %v1309
      %1439 = vst.msk [vmem:[%s226 + $0xf4] sm:$0xf] %vm1377, %v1310
      %1440 = vst.msk [vmem:[%s226 + $0xf8] sm:$0xf] %vm1377, %v1311
      %1441 = vst.msk [vmem:[%s226 + $0xfc] sm:$0xf] %vm1377, %v1312
      %s1442 = smul.u32 64, %s18
      %p1443 = scmp.lt.s32.totalorder %s1442, 127
      %s1444 = scalar_select %p1443, %s1442, 127
      %p1445 = scmp.lt.s32.totalorder %s19, 0
      %s1446 = scalar_select %p1445, %s19, 0
      %s1447 = sadd.s32 %s1446, %s1444
      %s1448 = smul.addr %s1447, 4
      %s1449 = scalar_lea.vmem %s3, %s1448
      // Predicated region
      $region33: #{tpu_custom_call.1} parent=31 // pred_check
        %p1450 = pneg %p124
      $region34: #{tpu_custom_call.1} parent=31 // pred_check_branch
        %1452 = sbr.rel (%p1450) target = $region36
      $region35: #{tpu_custom_call.1} parent=31 // pred_region
        %s1453 = smul.u32 64, %s18
      $region36: #{tpu_custom_call.1} parent=31 // pred_fallthru
        _
    $region32: #{tpu_custom_call.1} parent=5 // pred_fallthru
      _
    %p1454 = scmp.le.s32.totalorder 2, %s9
    // Predicated region
    $region37: #{tpu_custom_call.1} parent=5 // pred_check
      %p1455 = pneg %p1454
    $region38: #{tpu_custom_call.1} parent=5 // pred_check_branch
      %1457 = sbr.rel (%p1455) target = $region40
    $region39: #{tpu_custom_call.1} parent=5 // pred_region
      %s1458 = ssub.s32 %s9, 2
      // Predicated region
      $region41: #{tpu_custom_call.1} parent=39 // pred_check
        %p1459 = pneg %p130
      $region42: #{tpu_custom_call.1} parent=39 // pred_check_branch
        %1461 = sbr.rel (%p1459) target = $region44
      $region43: #{tpu_custom_call.1} parent=39 // pred_region
        %s1462 = smul.u32 64, %s20
        %p1463 = scmp.lt.s32.totalorder %s1462, 127
        %s1464 = scalar_select %p1463, %s1462, 127
        %p1465 = scmp.lt.s32.totalorder %s21, 0
        %s1466 = scalar_select %p1465, %s21, 0
        %s1467 = sadd.s32 %s1466, %s1464
        %s1468 = smul.addr %s1467, 4
        %s1469 = scalar_lea.vmem %s3, %s1468
      $region44: #{tpu_custom_call.1} parent=39 // pred_fallthru
        _
    $region40: #{tpu_custom_call.1} parent=5 // pred_fallthru
      _
  $region6: #{tpu_custom_call.1} parent=0 // loop_footer
    %s13 = sadd.s32 1, %s9
  $region7: #{tpu_custom_call.1} parent=0 // loop_footer_branch
    %8 = sbr.rel target = $region3
  $region8: #{tpu_custom_call.1} parent=0 // loop_exit
    _

</llo_original>
